<compile_context>
chip_gen: v5e
topology: v5e:2x2
jax: 0.10.0
libtpu: 0.0.40
codegen_flags: <defaults>
</compile_context>

<pallas_src>
import functools

import jax
import jax.numpy as jnp
from jax import lax
from jax.experimental import pallas as pl
from jax.experimental.pallas import tpu as pltpu


def _round_up(x, m):
    return (x + m - 1) // m * m


def _vmem_capacity_bytes():
    """Physical VMEM of the attached TPU generation (fallback: 64 MiB)."""
    try:
        info = pltpu.get_tpu_info()
        cap = int(getattr(info, "vmem_capacity_bytes", 0))
        if cap > 0:
            return cap
    except Exception:
        pass
    return 64 * 1024 * 1024  # conservative (v7x physical VMEM per core)


def _choose_tiles(rows, hw, budget):
    """Pick (ROW_BLK, T) for the pooling stream.

    Per-grid-step VMEM model (f32):
        2 * ROW_BLK * T * 4      double-buffered x stream tile
      +     ROW_BLK * 128 * 4    per-chunk accumulator scratch
    """
    rows8 = _round_up(max(rows, 1), 8)
    hw128 = _round_up(max(hw, 1), 128)

    # Largest row block whose minimal (T=128) footprint still fits the budget,
    # so huge B*C tiles the row axis instead of blowing past the VMEM limit.
    max_row_blk = max(8, (budget // ((2 * 128 + 128) * 4)) // 8 * 8)

    row_blk = min(rows8, max_row_blk)
    # Split the row axis into >= 2 "parallel" blocks (dual TensorCore on v7x)
    # when the problem is big enough that per-step overhead stays hidden.
    if row_blk == rows8 and rows8 >= 16 and rows8 * hw * 4 >= (8 << 20):
        row_blk = _round_up((rows8 + 1) // 2, 8)

    avail = budget - row_blk * 128 * 4
    t = (avail // (2 * row_blk * 4)) // 128 * 128
    t = min(max(t, 128), hw128)
    return row_blk, t


def _pool_kernel(x_ref, o_ref, acc_ref, *, hw, t, inv_hw, ragged):
    """Global average pool over the lane (spatial) axis.

    Grid axis 0: parallel row blocks (rows = B*C).
    Grid axis 1: streamed spatial tiles (the reduction axis).
    """
    s = pl.program_id(1)
    last = pl.num_programs(1) - 1
    n_chunks = t // 128
    row_blk = acc_ref.shape[0]

    @pl.when(s == 0)
    def _init():
        acc_ref[...] = jnp.zeros_like(acc_ref)

    def _accumulate(mask_tail):
        # Fold the (row_blk, T) tile into the (row_blk, 128) accumulator,
        # one lane-aligned 128-wide chunk at a time (pure VPU, fully hidden
        # under the HBM stream DMA).
        def body(j, carry):
            off = pl.multiple_of(j * 128, 128)
            chunk = x_ref[:, pl.ds(off, 128)].astype(jnp.float32)
            if mask_tail:
                col = (s * t + off
                       + lax.broadcasted_iota(jnp.int32, (row_blk, 128), 1))
                chunk = jnp.where(col < hw, chunk, 0.0)
            acc_ref[...] += chunk
            return carry

        lax.fori_loop(0, n_chunks, body, 0, unroll=min(8, n_chunks))

    if ragged:
        # Only the last spatial tile is ragged -> mask only there.
        @pl.when(s < last)
        def _steady():
            _accumulate(False)

        @pl.when(s == last)
        def _tail():
            _accumulate(True)
    else:
        _accumulate(False)

    @pl.when(s == last)
    def _finalize():
        # One tiny XLU reduce over 128 lanes + scale -> the global mean.
        o_ref[...] = jnp.sum(acc_ref[...], axis=-1, keepdims=True) * inv_hw


def _fc_kernel(p_ref, w1_ref, b1_ref, w2_ref, b2_ref, o_ref):
    # Everything is resident in VMEM; two tiny MXU matmuls + ReLU.
    h = jnp.dot(p_ref[...], w1_ref[...],
                preferred_element_type=jnp.float32) + b1_ref[...]
    h = jnp.maximum(h, 0.0)
    out = jnp.dot(h, w2_ref[...],
                  preferred_element_type=jnp.float32) + b2_ref[...]
    o_ref[...] = out.astype(o_ref.dtype)


def oalayer_forward(x, w1, b1, w2, b2, k, num_ops):
    """x: (B, C, H, W); w1: (C, hidden); w2: (hidden, k*num_ops)
    -> (B, k, num_ops) f32."""
    B, C, H, W = x.shape
    hidden = w1.shape[1]
    out_dim = w2.shape[1]
    assert out_dim == k * num_ops

    rows = B * C
    hw = H * W
    x2d = x.reshape(rows, hw)  # free reshape; no HBM copy, no padding of x

    cap = _vmem_capacity_bytes()
    budget = int(cap * 0.65)          # stream buffers + accumulator budget
    row_blk, t = _choose_tiles(rows, hw, budget)
    n_row_blocks = pl.cdiv(rows, row_blk)
    n_steps = pl.cdiv(hw, t)
    ragged = (hw % t) != 0

    # Actual footprint (+ margin for output blocks / Mosaic internal scratch).
    need = 2 * row_blk * t * 4 + row_blk * 128 * 4 + 4 * row_blk * 4
    vmem_limit = min(int(cap * 0.9), need + (8 << 20))

    pooled_col = pl.pallas_call(
        functools.partial(_pool_kernel, hw=hw, t=t,
                          inv_hw=1.0 / float(hw), ragged=ragged),
        out_shape=jax.ShapeDtypeStruct((rows, 1), jnp.float32),
        grid_spec=pltpu.PrefetchScalarGridSpec(
            num_scalar_prefetch=0,
            grid=(n_row_blocks, n_steps),
            in_specs=[
                # x stream; keep the default depth-2 pipelining (spend VMEM
                # on a bigger T rather than deeper buffering).
                pl.BlockSpec((row_blk, t), lambda r, s: (r, s)),
            ],
            out_specs=pl.BlockSpec((row_blk, 1), lambda r, s: (r, 0)),
            scratch_shapes=[pltpu.VMEM((row_blk, 128), jnp.float32)],
        ),
        compiler_params=pltpu.CompilerParams(
            dimension_semantics=("parallel", "arbitrary"),
            vmem_limit_bytes=vmem_limit,
        ),
        cost_estimate=pl.CostEstimate(
            flops=rows * hw,
            transcendentals=0,
            bytes_accessed=rows * hw * x.dtype.itemsize + rows * 4,
        ),
    )(x2d)

    pooled = pooled_col.reshape(B, C)

    # Tiny FC head (a corner of one MXU tile) as a single-invocation kernel.
    # Pad the output feature dim to a 128-lane multiple for an unmasked store.
    out_pad = _round_up(out_dim, 128)
    b1_2d = b1.reshape(1, hidden)
    if out_pad != out_dim:
        w2_p = jnp.pad(w2, ((0, 0), (0, out_pad - out_dim)))
        b2_p = jnp.pad(b2, (0, out_pad - out_dim))
    else:
        w2_p, b2_p = w2, b2
    b2_2d = b2_p.reshape(1, out_pad)

    y = pl.pallas_call(
        _fc_kernel,
        out_shape=jax.ShapeDtypeStruct((B, out_pad), jnp.float32),
    )(pooled, w1, b1_2d, w2_p, b2_2d)

    return y[:, :out_dim].reshape(B, k, num_ops)


def reference_forward(x, w1, b1, w2, b2, k, num_ops):
    """Pure-JAX reference matching the PyTorch module."""
    B = x.shape[0]
    pooled = jnp.mean(x, axis=(2, 3))            # (B, C)
    h = jnp.maximum(pooled @ w1 + b1, 0.0)       # (B, hidden)
    out = h @ w2 + b2                            # (B, k*num_ops)
    return out.reshape(B, k, num_ops)


if __name__ == "__main__":
    # Small shapes consistent with the module.
    B, C, H, W = 2, 4, 16, 16
    k, num_ops = 4, 8
    out_dim = k * num_ops        # 32
    hidden = out_dim * 2         # 64

    key = jax.random.PRNGKey(0)
    kx, k1, kb1, k2, kb2 = jax.random.split(key, 5)

    x = jax.random.normal(kx, (B, C, H, W), dtype=jnp.float32)

    # Deterministic parameter init (uniform in +/- 1/sqrt(fan_in), like torch Linear).
    lim1 = 1.0 / jnp.sqrt(jnp.float32(C))
    w1 = jax.random.uniform(k1, (C, hidden), jnp.float32, -lim1, lim1)
    b1 = jax.random.uniform(kb1, (hidden,), jnp.float32, -lim1, lim1)
    lim2 = 1.0 / jnp.sqrt(jnp.float32(hidden))
    w2 = jax.random.uniform(k2, (hidden, out_dim), jnp.float32, -lim2, lim2)
    b2 = jax.random.uniform(kb2, (out_dim,), jnp.float32, -lim2, lim2)

    y = oalayer_forward(x, w1, b1, w2, b2, k, num_ops)
    y = jax.block_until_ready(y)

    y_ref = reference_forward(x, w1, b1, w2, b2, k, num_ops)
    assert y.shape == (B, k, num_ops)
    assert jnp.allclose(y, y_ref, atol=2e-5, rtol=1e-5)

    print("KERNEL_OK")
</pallas_src>

<mosaic_0001>
module attributes {stable_mosaic.version = 11 : i64} {
  func.func @_pool_kernel(%arg0: i32, %arg1: i32, %arg2: memref<8x256xf32, #tpu.memory_space<vmem>>, %arg3: memref<8x1xf32, #tpu.memory_space<vmem>>, %arg4: memref<8x128xf32, #tpu.memory_space<vmem>>) attributes {dimension_semantics = [#tpu.dimension_semantics<parallel>, #tpu.dimension_semantics<arbitrary>], iteration_bounds = array<i64: 1, 1>, scalar_prefetch = 0 : i64, scratch_operands = 1 : i64, tpu.core_type = #tpu.core_type<tc>, window_params = [{transform_indices = @transform_0, window_bounds = array<i64: 8, 256>}, {transform_indices = @transform_1, window_bounds = array<i64: 8, 1>}]} {
    %c0_i32 = arith.constant 0 : i32
    %0 = arith.cmpi eq, %arg1, %c0_i32 : i32
    %1 = arith.extui %0 : i1 to i32
    %c0_i32_0 = arith.constant 0 : i32
    %2 = arith.cmpi ne, %1, %c0_i32_0 : i32
    scf.if %2 {
      %cst = arith.constant 0.000000e+00 : f32
      %20 = vector.broadcast %cst : f32 to vector<8x128xf32>
      %c0_14 = arith.constant 0 : index
      %c0_15 = arith.constant 0 : index
      %21 = vector.load %arg4[%c0_14, %c0_15] : memref<8x128xf32, #tpu.memory_space<vmem>>, vector<8x128xf32>
      tpu.vector_store %arg4[%c0_14, %c0_15], %20 {strides = array<i32>} : memref<8x128xf32, #tpu.memory_space<vmem>>, vector<8x128xf32>,
    } else {
    }
    %c0_i32_1 = arith.constant 0 : i32
    %c128_i32 = arith.constant 128 : i32
    %3 = arith.muli %c0_i32_1, %c128_i32 : i32
    %4 = tpu.assume_multiple %3, 128 : i32
    %c0 = arith.constant 0 : index
    %5 = arith.index_cast %4 : i32 to index
    %6 = vector.load %arg2[%c0, %5] : memref<8x256xf32, #tpu.memory_space<vmem>>, vector<8x128xf32>
    %c0_2 = arith.constant 0 : index
    %c0_3 = arith.constant 0 : index
    %7 = vector.load %arg4[%c0_2, %c0_3] : memref<8x128xf32, #tpu.memory_space<vmem>>, vector<8x128xf32>
    %8 = arith.addf %7, %6 : vector<8x128xf32>
    %c0_4 = arith.constant 0 : index
    %c0_5 = arith.constant 0 : index
    %9 = vector.load %arg4[%c0_4, %c0_5] : memref<8x128xf32, #tpu.memory_space<vmem>>, vector<8x128xf32>
    tpu.vector_store %arg4[%c0_4, %c0_5], %8 {strides = array<i32>} : memref<8x128xf32, #tpu.memory_space<vmem>>, vector<8x128xf32>,
    %c1_i32 = arith.constant 1 : i32
    %c128_i32_6 = arith.constant 128 : i32
    %10 = arith.muli %c1_i32, %c128_i32_6 : i32
    %11 = tpu.assume_multiple %10, 128 : i32
    %c0_7 = arith.constant 0 : index
    %12 = arith.index_cast %11 : i32 to index
    %13 = vector.load %arg2[%c0_7, %12] : memref<8x256xf32, #tpu.memory_space<vmem>>, vector<8x128xf32>
    %c0_8 = arith.constant 0 : index
    %c0_9 = arith.constant 0 : index
    %14 = vector.load %arg4[%c0_8, %c0_9] : memref<8x128xf32, #tpu.memory_space<vmem>>, vector<8x128xf32>
    %15 = arith.addf %14, %13 : vector<8x128xf32>
    %c0_10 = arith.constant 0 : index
    %c0_11 = arith.constant 0 : index
    %16 = vector.load %arg4[%c0_10, %c0_11] : memref<8x128xf32, #tpu.memory_space<vmem>>, vector<8x128xf32>
    tpu.vector_store %arg4[%c0_10, %c0_11], %15 {strides = array<i32>} : memref<8x128xf32, #tpu.memory_space<vmem>>, vector<8x128xf32>,
    %c2_i32 = arith.constant 2 : i32
    %c0_i32_12 = arith.constant 0 : i32
    %17 = arith.cmpi eq, %arg1, %c0_i32_12 : i32
    %18 = arith.extui %17 : i1 to i32
    %c0_i32_13 = arith.constant 0 : i32
    %19 = arith.cmpi ne, %18, %c0_i32_13 : i32
    scf.if %19 {
      %c0_14 = arith.constant 0 : index
      %c0_15 = arith.constant 0 : index
      %20 = vector.load %arg4[%c0_14, %c0_15] : memref<8x128xf32, #tpu.memory_space<vmem>>, vector<8x128xf32>
      %cst = arith.constant dense<0.000000e+00> : vector<8xf32>
      %21 = vector.multi_reduction <add>, %20, %cst [1] : vector<8x128xf32> to vector<8xf32>
      %22 = vector.shape_cast %21 : vector<8xf32> to vector<8x1xf32>
      %cst_16 = arith.constant 3.906250e-03 : f32
      %23 = vector.broadcast %cst_16 : f32 to vector<8x1xf32>
      %24 = arith.mulf %22, %23 : vector<8x1xf32>
      %c0_17 = arith.constant 0 : index
      %c0_18 = arith.constant 0 : index
      %25 = vector.load %arg3[%c0_17, %c0_18] : memref<8x1xf32, #tpu.memory_space<vmem>>, vector<8x1xf32>
      tpu.vector_store %arg3[%c0_17, %c0_18], %24 {strides = array<i32>} : memref<8x1xf32, #tpu.memory_space<vmem>>, vector<8x1xf32>,
    } else {
    }
    return
  }
  func.func @transform_0(%arg0: i32, %arg1: i32) -> (i32, i32) {
    %c0_i32 = arith.constant 0 : i32
    return %arg0, %arg1 : i32, i32
  }
  func.func @transform_1(%arg0: i32, %arg1: i32) -> (i32, i32) {
    %c0_i32 = arith.constant 0 : i32
    %c0_i32_0 = arith.constant 0 : i32
    return %arg0, %c0_i32 : i32, i32
  }
}

</mosaic_0001>

<llo_original>
// kernel: tpu_custom_call.1
$region0: #{tpu_custom_call.1}
  #allocation0 [shape = 'u32[]', space=smem, size = 0x4, offset = 0x4, fixed_abs, tag = 'smem constant byte address 0x4 - core index']
  #allocation1 [shape = 'u32[72,128]{1,0:T(1,128)}', space=vmem, size = 0x9000, scoped, tag = 'internal scratch']
  #allocation2 [shape = 'f32[8,128]{1,0:T(8,128)}', space=vmem, size = 0x1000, scoped, tag = 'scratch operand']
  %s0 = inlined_call_operand.hbm [shape: f32[8,256], index: 0, kind: input, shape index: {}]
  %s1 = inlined_call_operand.vmem [shape: f32[8,1], index: 1, kind: output, shape index: {}]
  %s2 = sld [smem:[#allocation0]]
  $region26: #{tpu_custom_call.1} parent=0
    _
  %s4 = ssub.s32 1, %s2
  %s5 = scalar_select 0, %s4, %s2
  $region1: #{tpu_custom_call.1} parent=0
    #allocation3 [shape = 'u8[8192]{0}', space=vmem, size = 0x2000, scoped, tag = 'input window, operand 0, single buffered']
    #allocation4 [shape = 's32[1]{0}', space=sflag, size = 0x4, scoped, tag = 'scoped memory for tpu_custom_call.1']
    %6 = vsyncpa [#allocation4], 0
    // Predicated region
    $region2: #{tpu_custom_call.1} parent=1 // pred_check
      _
    $region3: #{tpu_custom_call.1} parent=1 // pred_check_branch
      %8 = sbr.rel (0) target = $region5
    $region4: #{tpu_custom_call.1} parent=1 // pred_region
      %10 = vsyncadd [#allocation4], 0
      %s12 = sshll.u32 %s0, 4
      %s13 = int_to_ptr.hbm [resolvable:$true] %s12
      %s14 = sshll.u32 [#allocation3], 4
      %s15 = int_to_ptr.vmem [resolvable:$true] %s14
      %17 = dma.hbm_to_vmem [thread:$0]  %s13, 256, %s15, [#allocation4]
    $region5: #{tpu_custom_call.1} parent=1 // pred_fallthru
      _
    // Predicated region
    $region6: #{tpu_custom_call.1} parent=1 // pred_check
      _
    $region7: #{tpu_custom_call.1} parent=1 // pred_check_branch
      %19 = sbr.rel (0) target = $region9
    $region8: #{tpu_custom_call.1} parent=1 // pred_region
      %21 = dma.done [#allocation4], 256
    $region9: #{tpu_custom_call.1} parent=1 // pred_fallthru
      _
    %p22 = scmp.eq.s32.totalorder 0, 0
    // Predicated region
    $region10: #{tpu_custom_call.1} parent=1 // pred_check
      %p23 = pneg %p22
    $region11: #{tpu_custom_call.1} parent=1 // pred_check_branch
      %25 = sbr.rel (%p23) target = $region13
    $region12: #{tpu_custom_call.1} parent=1 // pred_region
      %26 = vst [vmem:[#allocation2] sm:$0xff] 0.0
    $region13: #{tpu_custom_call.1} parent=1 // pred_fallthru
      _
    %v27 = vld [vmem:[#allocation3] sm:$0xff]
    %v28 = vld [vmem:[#allocation2] sm:$0xff]
    %v29 = vadd.f32 %v28, %v27
    %30 = vst [vmem:[#allocation2] sm:$0xff] %v29
    %s31 = scalar_lea.vmem [#allocation3], 8
    %v32 = vld [vmem:[%s31] sm:$0xff]
    %v33 = vld [vmem:[#allocation2] sm:$0xff]
    %v34 = vadd.f32 %v33, %v32
    %35 = vst [vmem:[#allocation2] sm:$0xff] %v34
    // Predicated region
    $region14: #{tpu_custom_call.1} parent=1 // pred_check
      %p36 = pneg %p22
    $region15: #{tpu_custom_call.1} parent=1 // pred_check_branch
      %38 = sbr.rel (%p36) target = $region17
    $region16: #{tpu_custom_call.1} parent=1 // pred_region
      %v39 = vld [vmem:[#allocation2] sm:$0xff]
      %40 = vadd.xlane.f32.xlu0 %v39
      %v41 = vpop.xlane.xlu0 %40
      %v42 = vmul.f32 %v41, 0.00390625
      %vm43 = vcmask 7168
      %44 = vst.msk [vmem:[%s1] sm:$0xff] %vm43, %v42
    $region17: #{tpu_custom_call.1} parent=1 // pred_fallthru
      _
    // Predicated region
    $region18: #{tpu_custom_call.1} parent=1 // pred_check
      _
    $region19: #{tpu_custom_call.1} parent=1 // pred_check_branch
      %46 = sbr.rel (0) target = $region21
    $region20: #{tpu_custom_call.1} parent=1 // pred_region
      _
    $region21: #{tpu_custom_call.1} parent=1 // pred_fallthru
      _
    // Predicated region
    $region22: #{tpu_custom_call.1} parent=1 // pred_check
      _
    $region23: #{tpu_custom_call.1} parent=1 // pred_check_branch
      %48 = sbr.rel (0) target = $region25
    $region24: #{tpu_custom_call.1} parent=1 // pred_region
      _
    $region25: #{tpu_custom_call.1} parent=1 // pred_fallthru
      _
    %49 = vsyncpa [#allocation4], 1

</llo_original>
